<compile_context>
chip_gen: v5e
topology: v5e:2x2
jax: 0.10.0
libtpu: 0.0.40
codegen_flags: <defaults>
</compile_context>

<pallas_src>
import functools

import jax
import jax.numpy as jnp
from jax import lax
from jax.experimental import pallas as pl
from jax.experimental.pallas import tpu as pltpu


def _cross_patch_kernel(x_ref, xpk_ref, w1ap_ref, w1bbd_ref, w2bd_ref, mb_ref,
                        vec_ref, o_ref, *, num_patches, batch_tile):
    """One grid step: BT batch elements, M = BT*N rows of D features."""
    N, BT = num_patches, batch_tile
    x = x_ref[...]                                     # (M, D)
    M, D = x.shape

    P = vec_ref[...]                                   # (8, D) packed vectors
    b1 = P[0:1, :]                                     # relation linear-1 bias
    bp = P[1:2, :]                                     # context projection bias
    gamma = P[2:3, :]                                  # LayerNorm weight
    beta = P[3:4, :]                                   # LayerNorm bias

    offdiag = mb_ref[0]                                # (N, N): 1 off-diag, 0 diag
    sbias = mb_ref[1]                                  # (N, N): b2 off-diag, 0 diag

    # --- MXU 1 (independent): fused [a | xp] = x @ [W1a^T | Wp^T] ------------
    axp = jnp.dot(x, w1ap_ref[...], preferred_element_type=jnp.float32)   # (M, 2D)
    a = axp[:, :D] + b1                                # fold b1 into the i-side
    xp = axp[:, D:]                                    # x pre-projected by Wp^T

    # --- MXU 2 (independent): lane-packed j-side projection -----------------
    # c_pk[b, j*D+d] = (x[b, j] @ W1b^T)[d], via block-diagonal weight.
    xpk = xpk_ref[...].reshape(BT, N * D)              # (BT, N*D)
    c_pk = jnp.dot(xpk, w1bbd_ref[...],
                   preferred_element_type=jnp.float32)  # (BT, N*D)

    # --- Pair relu, fully lane-dense -----------------------------------------
    # h[b, i, j*D+d] = relu(a[b,i,d] + b1[d] + c[b,j,d])
    a3 = a.reshape(BT, N, D)
    a_rep = jnp.concatenate([a3] * N, axis=-1)          # (BT, N, N*D)
    h = jax.nn.relu(a_rep + c_pk[:, None, :])           # (BT, N, N*D)

    # --- MXU 3: D-reduction of the relation MLP via block-diag w2 ------------
    raw = jnp.dot(h.reshape(M, N * D), w2bd_ref[...],
                  preferred_element_type=jnp.float32)   # (M, N)
    # diag forced to exactly 0 (as in the PyTorch module); +b2 only off-diag.
    scores = raw.reshape(BT, N, N) * offdiag + sbias    # (BT, N, N)

    # --- Softmax over j (exp on EUP, approx reciprocal + 1 NR step) ----------
    mx = jnp.max(scores, axis=-1, keepdims=True)
    e = jnp.exp(scores - mx)
    s = jnp.sum(e, axis=-1, keepdims=True)
    r = pl.reciprocal(s, approx=True)
    r = r * (2.0 - s * r)                               # Newton-Raphson refine
    w = e * r                                           # (BT, N, N)

    # --- MXU 4: context aggregation straight into projected space ------------
    # (weights @ x) @ Wp^T  ==  weights @ (x @ Wp^T)  ==  weights @ xp
    proj = jnp.einsum('bij,bjd->bid', w, xp.reshape(BT, N, D),
                      preferred_element_type=jnp.float32).reshape(M, D) + bp

    # --- LayerNorm (two-pass variance, matches reference numerics) + residual
    mu = jnp.mean(proj, axis=-1, keepdims=True)
    d0 = proj - mu
    var = jnp.mean(d0 * d0, axis=-1, keepdims=True)
    ln = d0 * lax.rsqrt(var + 1e-5) * gamma + beta

    o_ref[...] = (x + ln).astype(o_ref.dtype)


def _default_batch_tile(B, N):
    """Feed both TensorCores on v7x; single grid step on v5e/v6e (1 TC)."""
    try:
        kind = jax.devices()[0].device_kind.lower()
    except Exception:
        kind = ""
    if "v7" in kind and B % 2 == 0 and ((B // 2) * N) % 8 == 0:
        return B // 2
    return B


def cross_patch_context(x, W1, b1, W2, b2, Wp, bp, gamma, beta, *, batch_tile=None):
    """Pallas implementation of CrossPatchContextModule.forward.

    x: [B, N, D] float32
    W1: [D, 2D], b1: [D]   (relation_transform linear 1)
    W2: [1, D],  b2: [1]   (relation_transform linear 2)
    Wp: [D, D],  bp: [D]   (context_projection linear)
    gamma, beta: [D]       (LayerNorm affine)
    """
    B, N, D = x.shape
    if batch_tile is None:
        batch_tile = _default_batch_tile(B, N)
    assert B % batch_tile == 0
    BT = batch_tile
    M = BT * N

    # Two views of the input: row-major rows for the matmuls / residual, and a
    # lane-packed per-batch view for the block-diagonal j-side projection.
    x_flat = x.reshape(B * N, D)
    x_pack = x.reshape(B, 1, N * D)

    # Fused, pre-transposed projection weights.
    W1ap_t = jnp.concatenate([jnp.transpose(W1[:, :D]), jnp.transpose(Wp)], axis=1)  # (D, 2D)
    eyeN = jnp.eye(N, dtype=x.dtype)
    W1b_bd = jnp.kron(eyeN, jnp.transpose(W1[:, D:]))          # (N*D, N*D) block-diag W1b^T
    W2_bd = jnp.kron(eyeN, W2[0][:, None])                     # (N*D, N)   block-diag w2

    # Diagonal handling: multiplicative off-diag mask + additive b2 bias.
    offdiag = 1.0 - eyeN
    mb = jnp.stack([offdiag, offdiag * b2[0]], axis=0)          # (2, N, N)

    # Packed per-feature parameter vectors (one sublane tile).
    params = jnp.zeros((8, D), x.dtype)
    params = params.at[0].set(b1).at[1].set(bp).at[2].set(gamma).at[3].set(beta)

    kernel = functools.partial(_cross_patch_kernel, num_patches=N, batch_tile=BT)

    out_flat = pl.pallas_call(
        kernel,
        out_shape=jax.ShapeDtypeStruct((B * N, D), x.dtype),
        grid_spec=pltpu.PrefetchScalarGridSpec(
            num_scalar_prefetch=0,
            grid=(B // BT,),
            in_specs=[
                pl.BlockSpec((M, D), lambda i: (i, 0)),               # x rows
                pl.BlockSpec((BT, 1, N * D), lambda i: (i, 0, 0)),    # x lane-packed
                pl.BlockSpec((D, 2 * D), lambda i: (0, 0)),           # [W1a^T | Wp^T]
                pl.BlockSpec((N * D, N * D), lambda i: (0, 0)),       # blockdiag(W1b^T)
                pl.BlockSpec((N * D, N), lambda i: (0, 0)),           # blockdiag(w2)
                pl.BlockSpec((2, N, N), lambda i: (0, 0, 0)),         # off-diag mask / b2 bias
                pl.BlockSpec((8, D), lambda i: (0, 0)),               # packed vectors
            ],
            out_specs=pl.BlockSpec((M, D), lambda i: (i, 0)),
        ),
        compiler_params=pltpu.CompilerParams(
            dimension_semantics=("parallel",)),
    )(x_flat, x_pack, W1ap_t, W1b_bd, W2_bd, mb, params)

    return out_flat.reshape(B, N, D)


def reference(x, W1, b1, W2, b2, Wp, bp, gamma, beta):
    """Pure-JAX reference mirroring the PyTorch forward exactly."""
    B, N, D = x.shape
    xi = jnp.broadcast_to(x[:, :, None, :], (B, N, N, D))
    xj = jnp.broadcast_to(x[:, None, :, :], (B, N, N, D))
    pair = jnp.concatenate([xi, xj], axis=-1)                 # [B, N, N, 2D]
    h = jax.nn.relu(pair @ W1.T + b1)
    s = (h @ W2.T + b2)[..., 0]                               # [B, N, N]
    eye = jnp.eye(N, dtype=bool)
    s = jnp.where(eye[None], 0.0, s)
    w = jax.nn.softmax(s, axis=-1)
    ctx = jnp.einsum('bij,bjd->bid', w, x)
    proj = ctx @ Wp.T + bp
    mu = proj.mean(-1, keepdims=True)
    var = ((proj - mu) ** 2).mean(-1, keepdims=True)
    ln = (proj - mu) / jnp.sqrt(var + 1e-5) * gamma + beta
    return x + ln


if __name__ == "__main__":
    B, N, D = 2, 8, 32
    key = jax.random.PRNGKey(0)
    keys = jax.random.split(key, 8)

    x = jax.random.normal(keys[0], (B, N, D), dtype=jnp.float32)

    # Deterministic synthetic parameters (shapes from the module's __init__).
    W1 = 0.1 * jax.random.normal(keys[1], (D, 2 * D), dtype=jnp.float32)
    b1 = 0.1 * jax.random.normal(keys[2], (D,), dtype=jnp.float32)
    W2 = 0.1 * jax.random.normal(keys[3], (1, D), dtype=jnp.float32)
    b2 = 0.1 * jax.random.normal(keys[4], (1,), dtype=jnp.float32)
    Wp = 0.1 * jax.random.normal(keys[5], (D, D), dtype=jnp.float32)
    bp = 0.1 * jax.random.normal(keys[6], (D,), dtype=jnp.float32)
    gamma = jnp.ones((D,), dtype=jnp.float32)
    beta = jnp.zeros((D,), dtype=jnp.float32)

    out = cross_patch_context(x, W1, b1, W2, b2, Wp, bp, gamma, beta)
    out = jax.block_until_ready(out)

    ref = reference(x, W1, b1, W2, b2, Wp, bp, gamma, beta)
    assert out.shape == (B, N, D)
    assert jnp.allclose(out, ref, atol=1e-4, rtol=1e-4), (
        float(jnp.max(jnp.abs(out - ref))))

    print("KERNEL_OK")
</pallas_src>

<mosaic_0001>
module attributes {stable_mosaic.version = 11 : i64} {
  func.func @_cross_patch_kernel(%arg0: i32, %arg1: memref<16x32xf32, #tpu.memory_space<vmem>>, %arg2: memref<2x1x256xf32, #tpu.memory_space<vmem>>, %arg3: memref<32x64xf32, #tpu.memory_space<vmem>>, %arg4: memref<256x256xf32, #tpu.memory_space<vmem>>, %arg5: memref<256x8xf32, #tpu.memory_space<vmem>>, %arg6: memref<2x8x8xf32, #tpu.memory_space<vmem>>, %arg7: memref<8x32xf32, #tpu.memory_space<vmem>>, %arg8: memref<16x32xf32, #tpu.memory_space<vmem>>) attributes {dimension_semantics = [#tpu.dimension_semantics<parallel>], iteration_bounds = array<i64: 1>, scalar_prefetch = 0 : i64, scratch_operands = 0 : i64, tpu.core_type = #tpu.core_type<tc>, window_params = [{transform_indices = @transform_0, window_bounds = array<i64: 16, 32>}, {transform_indices = @transform_1, window_bounds = array<i64: 2, 1, 256>}, {pipeline_mode = #tpu.pipeline_mode<synchronous>, transform_indices = @transform_2, window_bounds = array<i64: 32, 64>}, {pipeline_mode = #tpu.pipeline_mode<synchronous>, transform_indices = @transform_3, window_bounds = array<i64: 256, 256>}, {pipeline_mode = #tpu.pipeline_mode<synchronous>, transform_indices = @transform_4, window_bounds = array<i64: 256, 8>}, {pipeline_mode = #tpu.pipeline_mode<synchronous>, transform_indices = @transform_5, window_bounds = array<i64: 2, 8, 8>}, {pipeline_mode = #tpu.pipeline_mode<synchronous>, transform_indices = @transform_6, window_bounds = array<i64: 8, 32>}, {transform_indices = @transform_7, window_bounds = array<i64: 16, 32>}]} {
    %c0 = arith.constant 0 : index
    %c0_0 = arith.constant 0 : index
    %0 = vector.load %arg1[%c0, %c0_0] : memref<16x32xf32, #tpu.memory_space<vmem>>, vector<16x32xf32>
    %c0_1 = arith.constant 0 : index
    %c0_2 = arith.constant 0 : index
    %1 = vector.load %arg7[%c0_1, %c0_2] : memref<8x32xf32, #tpu.memory_space<vmem>>, vector<8x32xf32>
    %2 = vector.extract_strided_slice %1 {offsets = [0, 0], sizes = [1, 32], strides = [1, 1]} : vector<8x32xf32> to vector<1x32xf32>
    %3 = vector.extract_strided_slice %1 {offsets = [1, 0], sizes = [1, 32], strides = [1, 1]} : vector<8x32xf32> to vector<1x32xf32>
    %4 = vector.extract_strided_slice %1 {offsets = [2, 0], sizes = [1, 32], strides = [1, 1]} : vector<8x32xf32> to vector<1x32xf32>
    %5 = vector.extract_strided_slice %1 {offsets = [3, 0], sizes = [1, 32], strides = [1, 1]} : vector<8x32xf32> to vector<1x32xf32>
    %c0_3 = arith.constant 0 : index
    %c0_4 = arith.constant 0 : index
    %c0_5 = arith.constant 0 : index
    %6 = vector.load %arg6[%c0_3, %c0_4, %c0_5] : memref<2x8x8xf32, #tpu.memory_space<vmem>>, vector<1x8x8xf32>
    %7 = vector.shape_cast %6 : vector<1x8x8xf32> to vector<8x8xf32>
    %c1 = arith.constant 1 : index
    %c0_6 = arith.constant 0 : index
    %c0_7 = arith.constant 0 : index
    %8 = vector.load %arg6[%c1, %c0_6, %c0_7] : memref<2x8x8xf32, #tpu.memory_space<vmem>>, vector<1x8x8xf32>
    %9 = vector.shape_cast %8 : vector<1x8x8xf32> to vector<8x8xf32>
    %c0_8 = arith.constant 0 : index
    %c0_9 = arith.constant 0 : index
    %10 = vector.load %arg3[%c0_8, %c0_9] : memref<32x64xf32, #tpu.memory_space<vmem>>, vector<32x64xf32>
    %cst = arith.constant dense<0.000000e+00> : vector<16x64xf32>
    %11 = tpu.matmul %0, %10, %cst {dimension_numbers = #tpu.dot_dimension_numbers<[1], [0], [0], [1], [0, 0, 1, 1], [], []>} : vector<16x32xf32>, vector<32x64xf32>, vector<16x64xf32> -> vector<16x64xf32>
    %12 = vector.extract_strided_slice %11 {offsets = [0, 0], sizes = [16, 32], strides = [1, 1]} : vector<16x64xf32> to vector<16x32xf32>
    %13 = vector.broadcast %2 : vector<1x32xf32> to vector<16x32xf32>
    %14 = arith.addf %12, %13 : vector<16x32xf32>
    %15 = vector.extract_strided_slice %11 {offsets = [0, 32], sizes = [16, 32], strides = [1, 1]} : vector<16x64xf32> to vector<16x32xf32>
    %c0_10 = arith.constant 0 : index
    %c0_11 = arith.constant 0 : index
    %c0_12 = arith.constant 0 : index
    %16 = vector.load %arg2[%c0_10, %c0_11, %c0_12] : memref<2x1x256xf32, #tpu.memory_space<vmem>>, vector<2x1x256xf32>
    %17 = vector.shape_cast %16 : vector<2x1x256xf32> to vector<2x256xf32>
    %c0_13 = arith.constant 0 : index
    %c0_14 = arith.constant 0 : index
    %18 = vector.load %arg4[%c0_13, %c0_14] : memref<256x256xf32, #tpu.memory_space<vmem>>, vector<256x256xf32>
    %cst_15 = arith.constant dense<0.000000e+00> : vector<2x256xf32>
    %19 = tpu.matmul %17, %18, %cst_15 {dimension_numbers = #tpu.dot_dimension_numbers<[1], [0], [0], [1], [0, 0, 1, 1], [], []>} : vector<2x256xf32>, vector<256x256xf32>, vector<2x256xf32> -> vector<2x256xf32>
    %20 = vector.shape_cast %14 : vector<16x32xf32> to vector<2x8x32xf32>
    %21 = tpu.concatenate %20, %20, %20, %20, %20, %20, %20, %20 in 2 : vector<2x8x32xf32>, vector<2x8x32xf32>, vector<2x8x32xf32>, vector<2x8x32xf32>, vector<2x8x32xf32>, vector<2x8x32xf32>, vector<2x8x32xf32>, vector<2x8x32xf32> -> vector<2x8x256xf32>
    %22 = vector.shape_cast %19 : vector<2x256xf32> to vector<2x1x256xf32>
    %23 = vector.broadcast %22 : vector<2x1x256xf32> to vector<2x8x256xf32>
    %24 = arith.addf %21, %23 : vector<2x8x256xf32>
    %cst_16 = arith.constant 0.000000e+00 : f32
    %25 = vector.broadcast %cst_16 : f32 to vector<2x8x256xf32>
    %26 = arith.maximumf %24, %25 : vector<2x8x256xf32>
    %27 = vector.shape_cast %26 : vector<2x8x256xf32> to vector<16x256xf32>
    %c0_17 = arith.constant 0 : index
    %c0_18 = arith.constant 0 : index
    %28 = vector.load %arg5[%c0_17, %c0_18] : memref<256x8xf32, #tpu.memory_space<vmem>>, vector<256x8xf32>
    %cst_19 = arith.constant dense<0.000000e+00> : vector<16x8xf32>
    %29 = tpu.matmul %27, %28, %cst_19 {dimension_numbers = #tpu.dot_dimension_numbers<[1], [0], [0], [1], [0, 0, 1, 1], [], []>} : vector<16x256xf32>, vector<256x8xf32>, vector<16x8xf32> -> vector<16x8xf32>
    %30 = vector.shape_cast %29 : vector<16x8xf32> to vector<2x8x8xf32>
    %31 = vector.shape_cast %7 : vector<8x8xf32> to vector<1x8x8xf32>
    %32 = vector.broadcast %31 : vector<1x8x8xf32> to vector<2x8x8xf32>
    %33 = arith.mulf %30, %32 : vector<2x8x8xf32>
    %34 = vector.shape_cast %9 : vector<8x8xf32> to vector<1x8x8xf32>
    %35 = vector.broadcast %34 : vector<1x8x8xf32> to vector<2x8x8xf32>
    %36 = arith.addf %33, %35 : vector<2x8x8xf32>
    %cst_20 = arith.constant dense<0xFF800000> : vector<2x8xf32>
    %37 = vector.multi_reduction <maximumf>, %36, %cst_20 [2] : vector<2x8x8xf32> to vector<2x8xf32>
    %38 = vector.shape_cast %37 : vector<2x8xf32> to vector<2x8x1xf32>
    %39 = vector.broadcast %38 : vector<2x8x1xf32> to vector<2x8x8xf32>
    %40 = arith.subf %36, %39 : vector<2x8x8xf32>
    %41 = math.exp %40 : vector<2x8x8xf32>
    %cst_21 = arith.constant dense<0.000000e+00> : vector<2x8xf32>
    %42 = vector.multi_reduction <add>, %41, %cst_21 [2] : vector<2x8x8xf32> to vector<2x8xf32>
    %43 = vector.shape_cast %42 : vector<2x8xf32> to vector<2x8x1xf32>
    %44 = tpu.reciprocal %43 {approx = true} : vector<2x8x1xf32> -> vector<2x8x1xf32>
    %45 = arith.mulf %43, %44 : vector<2x8x1xf32>
    %cst_22 = arith.constant 2.000000e+00 : f32
    %46 = vector.broadcast %cst_22 : f32 to vector<2x8x1xf32>
    %47 = arith.subf %46, %45 : vector<2x8x1xf32>
    %48 = arith.mulf %44, %47 : vector<2x8x1xf32>
    %49 = vector.broadcast %48 : vector<2x8x1xf32> to vector<2x8x8xf32>
    %50 = arith.mulf %41, %49 : vector<2x8x8xf32>
    %51 = vector.shape_cast %15 : vector<16x32xf32> to vector<2x8x32xf32>
    "tpu.trace_start"() <{level = 10 : i32, message = "bij,bjd->bid"}> : () -> ()
    %cst_23 = arith.constant dense<0.000000e+00> : vector<2x8x32xf32>
    %52 = tpu.matmul %50, %51, %cst_23 {dimension_numbers = #tpu.dot_dimension_numbers<[2], [1], [1], [2], [0, 0, 0, 1, 1, 2], [0], [0]>} : vector<2x8x8xf32>, vector<2x8x32xf32>, vector<2x8x32xf32> -> vector<2x8x32xf32>
    "tpu.trace_stop"() : () -> ()
    %53 = vector.shape_cast %52 : vector<2x8x32xf32> to vector<16x32xf32>
    %54 = vector.broadcast %3 : vector<1x32xf32> to vector<16x32xf32>
    %55 = arith.addf %53, %54 : vector<16x32xf32>
    %cst_24 = arith.constant dense<0.000000e+00> : vector<16xf32>
    %56 = vector.multi_reduction <add>, %55, %cst_24 [1] : vector<16x32xf32> to vector<16xf32>
    %57 = vector.shape_cast %56 : vector<16xf32> to vector<16x1xf32>
    %cst_25 = arith.constant 3.200000e+01 : f32
    %58 = vector.broadcast %cst_25 : f32 to vector<16x1xf32>
    %59 = arith.divf %57, %58 : vector<16x1xf32>
    %60 = vector.broadcast %59 : vector<16x1xf32> to vector<16x32xf32>
    %61 = arith.subf %55, %60 : vector<16x32xf32>
    %62 = arith.mulf %61, %61 : vector<16x32xf32>
    %cst_26 = arith.constant dense<0.000000e+00> : vector<16xf32>
    %63 = vector.multi_reduction <add>, %62, %cst_26 [1] : vector<16x32xf32> to vector<16xf32>
    %64 = vector.shape_cast %63 : vector<16xf32> to vector<16x1xf32>
    %cst_27 = arith.constant 3.200000e+01 : f32
    %65 = vector.broadcast %cst_27 : f32 to vector<16x1xf32>
    %66 = arith.divf %64, %65 : vector<16x1xf32>
    %cst_28 = arith.constant 9.99999974E-6 : f32
    %67 = vector.broadcast %cst_28 : f32 to vector<16x1xf32>
    %68 = arith.addf %66, %67 : vector<16x1xf32>
    %69 = math.rsqrt %68 : vector<16x1xf32>
    %70 = vector.broadcast %69 : vector<16x1xf32> to vector<16x32xf32>
    %71 = arith.mulf %61, %70 : vector<16x32xf32>
    %72 = vector.broadcast %4 : vector<1x32xf32> to vector<16x32xf32>
    %73 = arith.mulf %71, %72 : vector<16x32xf32>
    %74 = vector.broadcast %5 : vector<1x32xf32> to vector<16x32xf32>
    %75 = arith.addf %73, %74 : vector<16x32xf32>
    %76 = arith.addf %0, %75 : vector<16x32xf32>
    %c0_29 = arith.constant 0 : index
    %c0_30 = arith.constant 0 : index
    %77 = vector.load %arg8[%c0_29, %c0_30] : memref<16x32xf32, #tpu.memory_space<vmem>>, vector<16x32xf32>
    tpu.vector_store %arg8[%c0_29, %c0_30], %76 {strides = array<i32>} : memref<16x32xf32, #tpu.memory_space<vmem>>, vector<16x32xf32>,
    return
  }
  func.func @transform_0(%arg0: i32) -> (i32, i32) {
    %c0_i32 = arith.constant 0 : i32
    %c0_i32_0 = arith.constant 0 : i32
    return %arg0, %c0_i32 : i32, i32
  }
  func.func @transform_1(%arg0: i32) -> (i32, i32, i32) {
    %c0_i32 = arith.constant 0 : i32
    %c0_i32_0 = arith.constant 0 : i32
    %c0_i32_1 = arith.constant 0 : i32
    return %arg0, %c0_i32, %c0_i32_0 : i32, i32, i32
  }
  func.func @transform_2(%arg0: i32) -> (i32, i32) {
    %c0_i32 = arith.constant 0 : i32
    %c0_i32_0 = arith.constant 0 : i32
    %c0_i32_1 = arith.constant 0 : i32
    return %c0_i32, %c0_i32_0 : i32, i32
  }
  func.func @transform_3(%arg0: i32) -> (i32, i32) {
    %c0_i32 = arith.constant 0 : i32
    %c0_i32_0 = arith.constant 0 : i32
    %c0_i32_1 = arith.constant 0 : i32
    return %c0_i32, %c0_i32_0 : i32, i32
  }
  func.func @transform_4(%arg0: i32) -> (i32, i32) {
    %c0_i32 = arith.constant 0 : i32
    %c0_i32_0 = arith.constant 0 : i32
    %c0_i32_1 = arith.constant 0 : i32
    return %c0_i32, %c0_i32_0 : i32, i32
  }
  func.func @transform_5(%arg0: i32) -> (i32, i32, i32) {
    %c0_i32 = arith.constant 0 : i32
    %c0_i32_0 = arith.constant 0 : i32
    %c0_i32_1 = arith.constant 0 : i32
    %c0_i32_2 = arith.constant 0 : i32
    return %c0_i32, %c0_i32_0, %c0_i32_1 : i32, i32, i32
  }
  func.func @transform_6(%arg0: i32) -> (i32, i32) {
    %c0_i32 = arith.constant 0 : i32
    %c0_i32_0 = arith.constant 0 : i32
    %c0_i32_1 = arith.constant 0 : i32
    return %c0_i32, %c0_i32_0 : i32, i32
  }
  func.func @transform_7(%arg0: i32) -> (i32, i32) {
    %c0_i32 = arith.constant 0 : i32
    %c0_i32_0 = arith.constant 0 : i32
    return %arg0, %c0_i32 : i32, i32
  }
}

</mosaic_0001>

<llo_original>
// kernel: tpu_custom_call.1
$region0: #{tpu_custom_call.1}
  #allocation0 [shape = 'u32[]', space=smem, size = 0x4, offset = 0x4, fixed_abs, tag = 'smem constant byte address 0x4 - core index']
  #allocation1 [shape = 'u32[72,128]{1,0:T(1,128)}', space=vmem, size = 0x9000, scoped, tag = 'internal scratch']
  %s0 = inlined_call_operand.vmem [shape: f32[16,32], index: 0, kind: input, shape index: {}]
  %s1 = inlined_call_operand.vmem [shape: f32[2,1,256], index: 1, kind: input, shape index: {}]
  %s2 = inlined_call_operand.vmem [shape: f32[32,64], index: 2, kind: input, shape index: {}]
  %s3 = inlined_call_operand.hbm [shape: f32[256,256], index: 3, kind: input, shape index: {}]
  %s4 = inlined_call_operand.vmem [shape: f32[256,8], index: 4, kind: input, shape index: {}]
  %s5 = inlined_call_operand.vmem [shape: f32[2,8,8], index: 5, kind: input, shape index: {}]
  %s6 = inlined_call_operand.vmem [shape: f32[8,32], index: 6, kind: input, shape index: {}]
  %s7 = inlined_call_operand.hbm [shape: f32[16,32], index: 7, kind: output, shape index: {}]
  %s8 = sld [smem:[#allocation0]]
  $region42: #{tpu_custom_call.1} parent=0
    _
  %s10 = ssub.s32 1, %s8
  %s11 = scalar_select 0, %s10, %s8
  $region1: #{tpu_custom_call.1} parent=0
    #allocation2 [shape = 'u8[262144]{0}', space=vmem, size = 0x40000, scoped, tag = 'input window, operand 3, single buffered']
    #allocation3 [shape = 's32[1]{0}', space=sflag, size = 0x4, scoped, tag = 'scoped memory for tpu_custom_call.1']
    #allocation4 [shape = 's32[1]{0}', space=sflag, size = 0x4, scoped, tag = 'scoped memory for tpu_custom_call.1']
    #allocation5 [shape = 'u8[8192]{0}', space=vmem, size = 0x2000, scoped, tag = 'output window, operand 0, single buffered']
    %12 = vsyncpa [#allocation3], 0
    %13 = vsyncpa [#allocation4], 0
    // Predicated region
    $region2: #{tpu_custom_call.1} parent=1 // pred_check
      _
    $region3: #{tpu_custom_call.1} parent=1 // pred_check_branch
      %15 = sbr.rel (0) target = $region5
    $region4: #{tpu_custom_call.1} parent=1 // pred_region
      _
    $region5: #{tpu_custom_call.1} parent=1 // pred_fallthru
      _
    // Predicated region
    $region6: #{tpu_custom_call.1} parent=1 // pred_check
      _
    $region7: #{tpu_custom_call.1} parent=1 // pred_check_branch
      %17 = sbr.rel (0) target = $region9
    $region8: #{tpu_custom_call.1} parent=1 // pred_region
      _
    $region9: #{tpu_custom_call.1} parent=1 // pred_fallthru
      _
    // Predicated region
    $region10: #{tpu_custom_call.1} parent=1 // pred_check
      _
    $region11: #{tpu_custom_call.1} parent=1 // pred_check_branch
      %19 = sbr.rel (0) target = $region13
    $region12: #{tpu_custom_call.1} parent=1 // pred_region
      _
    $region13: #{tpu_custom_call.1} parent=1 // pred_fallthru
      _
    // Predicated region
    $region14: #{tpu_custom_call.1} parent=1 // pred_check
      _
    $region15: #{tpu_custom_call.1} parent=1 // pred_check_branch
      %21 = sbr.rel (0) target = $region17
    $region16: #{tpu_custom_call.1} parent=1 // pred_region
      %23 = vsyncadd [#allocation3], 0
      %s24 = sshll.u32 %s3, 4
      %s25 = int_to_ptr.hbm [resolvable:$true] %s24
      %s26 = sshll.u32 [#allocation2], 4
      %s27 = int_to_ptr.vmem [resolvable:$true] %s26
      %32 = dma.hbm_to_vmem [thread:$0]  %s25, 8192, %s27, [#allocation3], 256, 256, 16
    $region17: #{tpu_custom_call.1} parent=1 // pred_fallthru
      _
    // Predicated region
    $region18: #{tpu_custom_call.1} parent=1 // pred_check
      _
    $region19: #{tpu_custom_call.1} parent=1 // pred_check_branch
      %34 = sbr.rel (0) target = $region21
    $region20: #{tpu_custom_call.1} parent=1 // pred_region
      _
    $region21: #{tpu_custom_call.1} parent=1 // pred_fallthru
      _
    // Predicated region
    $region22: #{tpu_custom_call.1} parent=1 // pred_check
      _
    $region23: #{tpu_custom_call.1} parent=1 // pred_check_branch
      %36 = sbr.rel (0) target = $region25
    $region24: #{tpu_custom_call.1} parent=1 // pred_region
      _
    $region25: #{tpu_custom_call.1} parent=1 // pred_fallthru
      _
    // Predicated region
    $region26: #{tpu_custom_call.1} parent=1 // pred_check
      _
    $region27: #{tpu_custom_call.1} parent=1 // pred_check_branch
      %38 = sbr.rel (0) target = $region29
    $region28: #{tpu_custom_call.1} parent=1 // pred_region
      _
    $region29: #{tpu_custom_call.1} parent=1 // pred_fallthru
      _
    // Predicated region
    $region30: #{tpu_custom_call.1} parent=1 // pred_check
      _
    $region31: #{tpu_custom_call.1} parent=1 // pred_check_branch
      %40 = sbr.rel (0) target = $region33
    $region32: #{tpu_custom_call.1} parent=1 // pred_region
      %42 = dma.done [#allocation3], 8192
    $region33: #{tpu_custom_call.1} parent=1 // pred_fallthru
      _
    %v43 = vld [vmem:[%s0] sm:$0xff]
    %v44 = vld [vmem:[%s0 + $0x8] sm:$0xff]
    %v45 = vld [vmem:[%s6] sm:$0xff]
    %v46 = vld [vmem:[%s5] sm:$0xff]
    %s47 = scalar_lea.vmem %s5, 8
    %v48 = vld [vmem:[%s47] sm:$0xff]
    %v49 = vld [vmem:[%s2] sm:$0xff]
    %v50 = vld [vmem:[%s2 + $0x8] sm:$0xff]
    %v51 = vld [vmem:[%s2 + $0x10] sm:$0xff]
    %v52 = vld [vmem:[%s2 + $0x18] sm:$0xff]
    %vm53 = vcmask 261120
    %v55 = vsel %vm53, %v43, 0
    %v58 = vsel %vm53, %v44, 0
    %60 = vmatpush.msra.mxu0 0.0
    %61 = vmatpush.msra.mxu0 0.0
    %62 = vmatpush.msra.mxu0 0.0
    %63 = vmatpush.msra.mxu0 0.0
    %64 = vmatpush.msra.mxu0 0.0
    %65 = vmatpush.msra.mxu0 0.0
    %66 = vmatpush.msra.mxu0 0.0
    %67 = vmatpush.msra.mxu0 0.0
    %68 = vmatpush.msra.mxu0 0.0
    %69 = vmatpush.msra.mxu0 0.0
    %70 = vmatpush.msra.mxu0 0.0
    %71 = vmatpush.msra.mxu0 0.0
    %72 = vmatpush.msra.mxu0 %v52
    %73 = vmatpush.msra.mxu0 %v51
    %74 = vmatpush.msra.mxu0 %v50
    %75 = vmatpush.msra.mxu0 %v49
    %76 = vmatmul.f32.gmra.mxu0 %v55
    %v77 = vpop.f32.mrf.mxu0
    %v78 = vadd.f32 0.0, %v77
    %79 = vmatmul.f32.gmra.mxu0 %v58
    %v80 = vpop.f32.mrf.mxu0
    %v81 = vadd.f32 0.0, %v80
    %82 = vdwg.mxu0
    %v83 = vperm.slane %v45, 0
    %v84 = vadd.f32 %v78, %v83
    %v85 = vadd.f32 %v81, %v83
    %v86 = vld [vmem:[%s1] sm:$0x3]
    %v87 = vld [vmem:[%s1 + $0x2] sm:$0x3]
    %v88 = vld [vmem:[#allocation2] sm:$0xff]
    %v89 = vld [vmem:[#allocation2 + $0x8] sm:$0xff]
    %v90 = vld [vmem:[#allocation2 + $0x10] sm:$0xff]
    %v91 = vld [vmem:[#allocation2 + $0x18] sm:$0xff]
    %v92 = vld [vmem:[#allocation2 + $0x20] sm:$0xff]
    %v93 = vld [vmem:[#allocation2 + $0x28] sm:$0xff]
    %v94 = vld [vmem:[#allocation2 + $0x30] sm:$0xff]
    %v95 = vld [vmem:[#allocation2 + $0x38] sm:$0xff]
    %v96 = vld [vmem:[#allocation2 + $0x40] sm:$0xff]
    %v97 = vld [vmem:[#allocation2 + $0x48] sm:$0xff]
    %v98 = vld [vmem:[#allocation2 + $0x50] sm:$0xff]
    %v99 = vld [vmem:[#allocation2 + $0x58] sm:$0xff]
    %v100 = vld [vmem:[#allocation2 + $0x60] sm:$0xff]
    %v101 = vld [vmem:[#allocation2 + $0x68] sm:$0xff]
    %v102 = vld [vmem:[#allocation2 + $0x70] sm:$0xff]
    %v103 = vld [vmem:[#allocation2 + $0x78] sm:$0xff]
    %v104 = vld [vmem:[#allocation2 + $0x80] sm:$0xff]
    %v105 = vld [vmem:[#allocation2 + $0x88] sm:$0xff]
    %v106 = vld [vmem:[#allocation2 + $0x90] sm:$0xff]
    %v107 = vld [vmem:[#allocation2 + $0x98] sm:$0xff]
    %v108 = vld [vmem:[#allocation2 + $0xa0] sm:$0xff]
    %v109 = vld [vmem:[#allocation2 + $0xa8] sm:$0xff]
    %v110 = vld [vmem:[#allocation2 + $0xb0] sm:$0xff]
    %v111 = vld [vmem:[#allocation2 + $0xb8] sm:$0xff]
    %v112 = vld [vmem:[#allocation2 + $0xc0] sm:$0xff]
    %v113 = vld [vmem:[#allocation2 + $0xc8] sm:$0xff]
    %v114 = vld [vmem:[#allocation2 + $0xd0] sm:$0xff]
    %v115 = vld [vmem:[#allocation2 + $0xd8] sm:$0xff]
    %v116 = vld [vmem:[#allocation2 + $0xe0] sm:$0xff]
    %v117 = vld [vmem:[#allocation2 + $0xe8] sm:$0xff]
    %v118 = vld [vmem:[#allocation2 + $0xf0] sm:$0xff]
    %v119 = vld [vmem:[#allocation2 + $0xf8] sm:$0xff]
    %v120 = vld [vmem:[#allocation2 + $0x100] sm:$0xff]
    %v121 = vld [vmem:[#allocation2 + $0x108] sm:$0xff]
    %v122 = vld [vmem:[#allocation2 + $0x110] sm:$0xff]
    %v123 = vld [vmem:[#allocation2 + $0x118] sm:$0xff]
    %v124 = vld [vmem:[#allocation2 + $0x120] sm:$0xff]
    %v125 = vld [vmem:[#allocation2 + $0x128] sm:$0xff]
    %v126 = vld [vmem:[#allocation2 + $0x130] sm:$0xff]
    %v127 = vld [vmem:[#allocation2 + $0x138] sm:$0xff]
    %v128 = vld [vmem:[#allocation2 + $0x140] sm:$0xff]
    %v129 = vld [vmem:[#allocation2 + $0x148] sm:$0xff]
    %v130 = vld [vmem:[#allocation2 + $0x150] sm:$0xff]
    %v131 = vld [vmem:[#allocation2 + $0x158] sm:$0xff]
    %v132 = vld [vmem:[#allocation2 + $0x160] sm:$0xff]
    %v133 = vld [vmem:[#allocation2 + $0x168] sm:$0xff]
    %v134 = vld [vmem:[#allocation2 + $0x170] sm:$0xff]
    %v135 = vld [vmem:[#allocation2 + $0x178] sm:$0xff]
    %v136 = vld [vmem:[#allocation2 + $0x180] sm:$0xff]
    %v137 = vld [vmem:[#allocation2 + $0x188] sm:$0xff]
    %v138 = vld [vmem:[#allocation2 + $0x190] sm:$0xff]
    %v139 = vld [vmem:[#allocation2 + $0x198] sm:$0xff]
    %v140 = vld [vmem:[#allocation2 + $0x1a0] sm:$0xff]
    %v141 = vld [vmem:[#allocation2 + $0x1a8] sm:$0xff]
    %v142 = vld [vmem:[#allocation2 + $0x1b0] sm:$0xff]
    %v143 = vld [vmem:[#allocation2 + $0x1b8] sm:$0xff]
    %v144 = vld [vmem:[#allocation2 + $0x1c0] sm:$0xff]
    %v145 = vld [vmem:[#allocation2 + $0x1c8] sm:$0xff]
    %v146 = vld [vmem:[#allocation2 + $0x1d0] sm:$0xff]
    %v147 = vld [vmem:[#allocation2 + $0x1d8] sm:$0xff]
    %v148 = vld [vmem:[#allocation2 + $0x1e0] sm:$0xff]
    %v149 = vld [vmem:[#allocation2 + $0x1e8] sm:$0xff]
    %v150 = vld [vmem:[#allocation2 + $0x1f0] sm:$0xff]
    %v151 = vld [vmem:[#allocation2 + $0x1f8] sm:$0xff]
    %154 = vst [vmem:[#allocation1] ss:$9 sm:$0xff] %v86
    %s155 = scalar_lea.vmem [#allocation1], 1
    %156 = vst [vmem:[%s155] ss:$9 sm:$0xff] %v87
    %v157 = vld [vmem:[#allocation1] sm:$0xff]
    %v158 = vld [vmem:[#allocation1 + $0x9] sm:$0xff]
    %161 = vmatpush.msra.mxu0 %v118
    %162 = vmatpush.msra.mxu0 %v116
    %163 = vmatpush.msra.mxu0 %v114
    %164 = vmatpush.msra.mxu0 %v112
    %165 = vmatpush.msra.mxu0 %v110
    %166 = vmatpush.msra.mxu0 %v108
    %167 = vmatpush.msra.mxu0 %v106
    %168 = vmatpush.msra.mxu0 %v104
    %169 = vmatpush.msra.mxu0 %v102
    %170 = vmatpush.msra.mxu0 %v100
    %171 = vmatpush.msra.mxu0 %v98
    %172 = vmatpush.msra.mxu0 %v96
    %173 = vmatpush.msra.mxu0 %v94
    %174 = vmatpush.msra.mxu0 %v92
    %175 = vmatpush.msra.mxu0 %v90
    %176 = vmatpush.msra.mxu0 %v88
    %177 = vmatmul.f32.gmra.mxu0 %v157
    %v178 = vpop.f32.mrf.mxu0
    %v179 = vadd.f32 0.0, %v178
    %180 = vdwg.mxu0
    %181 = vmatpush.msra.mxu0 %v150
    %182 = vmatpush.msra.mxu0 %v148
    %183 = vmatpush.msra.mxu0 %v146
    %184 = vmatpush.msra.mxu0 %v144
    %185 = vmatpush.msra.mxu0 %v142
    %186 = vmatpush.msra.mxu0 %v140
    %187 = vmatpush.msra.mxu0 %v138
    %188 = vmatpush.msra.mxu0 %v136
    %189 = vmatpush.msra.mxu0 %v134
    %190 = vmatpush.msra.mxu0 %v132
    %191 = vmatpush.msra.mxu0 %v130
    %192 = vmatpush.msra.mxu0 %v128
    %193 = vmatpush.msra.mxu0 %v126
    %194 = vmatpush.msra.mxu0 %v124
    %195 = vmatpush.msra.mxu0 %v122
    %196 = vmatpush.msra.mxu0 %v120
    %197 = vmatmul.f32.gmra.mxu0 %v158
    %v198 = vpop.f32.mrf.mxu0
    %v199 = vadd.f32 %v179, %v198
    %200 = vdwg.mxu0
    %201 = vmatpush.msra.mxu0 %v119
    %202 = vmatpush.msra.mxu0 %v117
    %203 = vmatpush.msra.mxu0 %v115
    %204 = vmatpush.msra.mxu0 %v113
    %205 = vmatpush.msra.mxu0 %v111
    %206 = vmatpush.msra.mxu0 %v109
    %207 = vmatpush.msra.mxu0 %v107
    %208 = vmatpush.msra.mxu0 %v105
    %209 = vmatpush.msra.mxu0 %v103
    %210 = vmatpush.msra.mxu0 %v101
    %211 = vmatpush.msra.mxu0 %v99
    %212 = vmatpush.msra.mxu0 %v97
    %213 = vmatpush.msra.mxu0 %v95
    %214 = vmatpush.msra.mxu0 %v93
    %215 = vmatpush.msra.mxu0 %v91
    %216 = vmatpush.msra.mxu0 %v89
    %217 = vmatmul.f32.gmra.mxu0 %v157
    %v218 = vpop.f32.mrf.mxu0
    %v219 = vadd.f32 0.0, %v218
    %220 = vdwg.mxu0
    %221 = vmatpush.msra.mxu0 %v151
    %222 = vmatpush.msra.mxu0 %v149
    %223 = vmatpush.msra.mxu0 %v147
    %224 = vmatpush.msra.mxu0 %v145
    %225 = vmatpush.msra.mxu0 %v143
    %226 = vmatpush.msra.mxu0 %v141
    %227 = vmatpush.msra.mxu0 %v139
    %228 = vmatpush.msra.mxu0 %v137
    %229 = vmatpush.msra.mxu0 %v135
    %230 = vmatpush.msra.mxu0 %v133
    %231 = vmatpush.msra.mxu0 %v131
    %232 = vmatpush.msra.mxu0 %v129
    %233 = vmatpush.msra.mxu0 %v127
    %234 = vmatpush.msra.mxu0 %v125
    %235 = vmatpush.msra.mxu0 %v123
    %236 = vmatpush.msra.mxu0 %v121
    %237 = vmatmul.f32.gmra.mxu0 %v158
    %v238 = vpop.f32.mrf.mxu0
    %v239 = vadd.f32 %v219, %v238
    %240 = vdwg.mxu0
    %243 = vrot.lane.b32.xlu0 %v84, 32
    %v244 = vpop.permute.xlu0 %243
    %245 = vrot.lane.b32.xlu0 %v85, 32
    %v246 = vpop.permute.xlu0 %245
    %249 = vrot.lane.b32.xlu0 %v84, 64
    %v250 = vpop.permute.xlu0 %249
    %251 = vrot.lane.b32.xlu0 %v85, 64
    %v252 = vpop.permute.xlu0 %251
    %255 = vrot.lane.b32.xlu0 %v84, 96
    %v256 = vpop.permute.xlu0 %255
    %257 = vrot.lane.b32.xlu0 %v85, 96
    %v258 = vpop.permute.xlu0 %257
    %v261 = vsel %vm53, %v84, %v244
    %v262 = vsel %vm53, %v85, %v246
    %vm263 = vcmask 523264
    %v264 = vsel %vm263, %v261, %v250
    %v265 = vsel %vm263, %v262, %v252
    %vm266 = vcmask 785408
    %v267 = vsel %vm266, %v264, %v256
    %v268 = vsel %vm266, %v265, %v258
    %v271 = vrot.slane %v239, 7
    %vm272 = vcmask 1040384
    %v273 = vsel %vm272, %v199, %v271
    %vm274 = vcmask 1041409
    %v275 = vsel %vm274, %v199, %v271
    %v276 = vrot.slane %v275, 1
    %v277 = vperm.slane %v273, 0
    %v278 = vperm.slane %v273, 1
    %v279 = vperm.slane %v276, 0
    %v280 = vperm.slane %v276, 1
    %v285 = vadd.f32 %v267, %v277
    %v286 = vadd.f32 %v267, %v278
    %v287 = vadd.f32 %v268, %v279
    %v288 = vadd.f32 %v268, %v280
    %v289 = vmax.f32 %v285, 0.0
    %v290 = vmax.f32 %v286, 0.0
    %v291 = vmax.f32 %v287, 0.0
    %v292 = vmax.f32 %v288, 0.0
    %v293 = vld [vmem:[%s4] sm:$0xff]
    %v294 = vld [vmem:[%s4 + $0x8] sm:$0xff]
    %v295 = vld [vmem:[%s4 + $0x10] sm:$0xff]
    %v296 = vld [vmem:[%s4 + $0x18] sm:$0xff]
    %v297 = vld [vmem:[%s4 + $0x20] sm:$0xff]
    %v298 = vld [vmem:[%s4 + $0x28] sm:$0xff]
    %v299 = vld [vmem:[%s4 + $0x30] sm:$0xff]
    %v300 = vld [vmem:[%s4 + $0x38] sm:$0xff]
    %v301 = vld [vmem:[%s4 + $0x40] sm:$0xff]
    %v302 = vld [vmem:[%s4 + $0x48] sm:$0xff]
    %v303 = vld [vmem:[%s4 + $0x50] sm:$0xff]
    %v304 = vld [vmem:[%s4 + $0x58] sm:$0xff]
    %v305 = vld [vmem:[%s4 + $0x60] sm:$0xff]
    %v306 = vld [vmem:[%s4 + $0x68] sm:$0xff]
    %v307 = vld [vmem:[%s4 + $0x70] sm:$0xff]
    %v308 = vld [vmem:[%s4 + $0x78] sm:$0xff]
    %v309 = vld [vmem:[%s4 + $0x80] sm:$0xff]
    %v310 = vld [vmem:[%s4 + $0x88] sm:$0xff]
    %v311 = vld [vmem:[%s4 + $0x90] sm:$0xff]
    %v312 = vld [vmem:[%s4 + $0x98] sm:$0xff]
    %v313 = vld [vmem:[%s4 + $0xa0] sm:$0xff]
    %v314 = vld [vmem:[%s4 + $0xa8] sm:$0xff]
    %v315 = vld [vmem:[%s4 + $0xb0] sm:$0xff]
    %v316 = vld [vmem:[%s4 + $0xb8] sm:$0xff]
    %v317 = vld [vmem:[%s4 + $0xc0] sm:$0xff]
    %v318 = vld [vmem:[%s4 + $0xc8] sm:$0xff]
    %v319 = vld [vmem:[%s4 + $0xd0] sm:$0xff]
    %v320 = vld [vmem:[%s4 + $0xd8] sm:$0xff]
    %v321 = vld [vmem:[%s4 + $0xe0] sm:$0xff]
    %v322 = vld [vmem:[%s4 + $0xe8] sm:$0xff]
    %v323 = vld [vmem:[%s4 + $0xf0] sm:$0xff]
    %v324 = vld [vmem:[%s4 + $0xf8] sm:$0xff]
    %325 = vmatpush.msra.mxu0 %v308
    %326 = vmatpush.msra.mxu0 %v307
    %327 = vmatpush.msra.mxu0 %v306
    %328 = vmatpush.msra.mxu0 %v305
    %329 = vmatpush.msra.mxu0 %v304
    %330 = vmatpush.msra.mxu0 %v303
    %331 = vmatpush.msra.mxu0 %v302
    %332 = vmatpush.msra.mxu0 %v301
    %333 = vmatpush.msra.mxu0 %v300
    %334 = vmatpush.msra.mxu0 %v299
    %335 = vmatpush.msra.mxu0 %v298
    %336 = vmatpush.msra.mxu0 %v297
    %337 = vmatpush.msra.mxu0 %v296
    %338 = vmatpush.msra.mxu0 %v295
    %339 = vmatpush.msra.mxu0 %v294
    %340 = vmatpush.msra.mxu0 %v293
    %341 = vmatmul.f32.gmra.mxu0 %v289
    %v342 = vpop.f32.mrf.mxu0
    %v343 = vadd.f32 0.0, %v342
    %344 = vmatmul.f32.gmra.mxu0 %v291
    %v345 = vpop.f32.mrf.mxu0
    %v346 = vadd.f32 0.0, %v345
    %347 = vdwg.mxu0
    %348 = vmatpush.msra.mxu0 %v324
    %349 = vmatpush.msra.mxu0 %v323
    %350 = vmatpush.msra.mxu0 %v322
    %351 = vmatpush.msra.mxu0 %v321
    %352 = vmatpush.msra.mxu0 %v320
    %353 = vmatpush.msra.mxu0 %v319
    %354 = vmatpush.msra.mxu0 %v318
    %355 = vmatpush.msra.mxu0 %v317
    %356 = vmatpush.msra.mxu0 %v316
    %357 = vmatpush.msra.mxu0 %v315
    %358 = vmatpush.msra.mxu0 %v314
    %359 = vmatpush.msra.mxu0 %v313
    %360 = vmatpush.msra.mxu0 %v312
    %361 = vmatpush.msra.mxu0 %v311
    %362 = vmatpush.msra.mxu0 %v310
    %363 = vmatpush.msra.mxu0 %v309
    %364 = vmatmul.f32.gmra.mxu0 %v290
    %v365 = vpop.f32.mrf.mxu0
    %v366 = vadd.f32 %v343, %v365
    %367 = vmatmul.f32.gmra.mxu0 %v292
    %v368 = vpop.f32.mrf.mxu0
    %v369 = vadd.f32 %v346, %v368
    %370 = vdwg.mxu0
    %v371 = vmul.f32 %v366, %v46
    %v372 = vmul.f32 %v369, %v46
    %v373 = vadd.f32 %v371, %v48
    %v374 = vadd.f32 %v372, %v48
    %vm375 = vcmask 64512
    %v376 = vsel %vm375, %v373, -inf
    %377 = vmax.xlane.f32.xlu0 %v376
    %v378 = vpop.xlane.xlu0 %377
    %v379 = vsel %vm375, %v374, -inf
    %380 = vmax.xlane.f32.xlu0 %v379
    %v381 = vpop.xlane.xlu0 %380
    %v382 = vsub.f32 %v373, %v378
    %v383 = vsub.f32 %v374, %v381
    %v384 = vmul.f32 %v382, 1.442695
    %v385 = vpow.pop %v384
    %v386 = vmul.f32 %v383, 1.442695
    %v387 = vpow.pop %v386
    %v388 = vsel %vm375, %v385, 0.0
    %389 = vadd.xlane.f32.xlu0 %v388
    %v390 = vpop.xlane.xlu0 %389
    %v391 = vsel %vm375, %v387, 0.0
    %392 = vadd.xlane.f32.xlu0 %v391
    %v393 = vpop.xlane.xlu0 %392
    %v394 = vrcp.pop %v390
    %v395 = vrcp.pop %v393
    %v396 = vmul.f32 %v390, %v394
    %v397 = vmul.f32 %v393, %v395
    %v398 = vsub.f32 2.0, %v396
    %v399 = vsub.f32 2.0, %v397
    %v400 = vmul.f32 %v394, %v398
    %v401 = vmul.f32 %v395, %v399
    %v402 = vmul.f32 %v385, %v400
    %v403 = vmul.f32 %v387, %v401
    %405 = vrot.lane.b32.xlu0 %v78, 96
    %v406 = vpop.permute.xlu0 %405
    %v409 = vsel %vm375, %v402, 0
    %411 = vmatpush.msra.mxu0 0.0
    %412 = vmatpush.msra.mxu0 0.0
    %413 = vmatpush.msra.mxu0 0.0
    %414 = vmatpush.msra.mxu0 0.0
    %415 = vmatpush.msra.mxu0 0.0
    %416 = vmatpush.msra.mxu0 0.0
    %417 = vmatpush.msra.mxu0 0.0
    %418 = vmatpush.msra.mxu0 0.0
    %419 = vmatpush.msra.mxu0 0.0
    %420 = vmatpush.msra.mxu0 0.0
    %421 = vmatpush.msra.mxu0 0.0
    %422 = vmatpush.msra.mxu0 0.0
    %423 = vmatpush.msra.mxu0 0.0
    %424 = vmatpush.msra.mxu0 0.0
    %425 = vmatpush.msra.mxu0 0.0
    %426 = vmatpush.msra.mxu0 %v406
    %427 = vmatmul.f32.gmra.mxu0 %v409
    %v428 = vpop.f32.mrf.mxu0
    %v429 = vadd.f32 0.0, %v428
    %430 = vdwg.mxu0
    %432 = vrot.lane.b32.xlu0 %v81, 96
    %v433 = vpop.permute.xlu0 %432
    %v436 = vsel %vm375, %v403, 0
    %438 = vmatpush.msra.mxu0 0.0
    %439 = vmatpush.msra.mxu0 0.0
    %440 = vmatpush.msra.mxu0 0.0
    %441 = vmatpush.msra.mxu0 0.0
    %442 = vmatpush.msra.mxu0 0.0
    %443 = vmatpush.msra.mxu0 0.0
    %444 = vmatpush.msra.mxu0 0.0
    %445 = vmatpush.msra.mxu0 0.0
    %446 = vmatpush.msra.mxu0 0.0
    %447 = vmatpush.msra.mxu0 0.0
    %448 = vmatpush.msra.mxu0 0.0
    %449 = vmatpush.msra.mxu0 0.0
    %450 = vmatpush.msra.mxu0 0.0
    %451 = vmatpush.msra.mxu0 0.0
    %452 = vmatpush.msra.mxu0 0.0
    %453 = vmatpush.msra.mxu0 %v433
    %454 = vmatmul.f32.gmra.mxu0 %v436
    %v455 = vpop.f32.mrf.mxu0
    %v456 = vadd.f32 0.0, %v455
    %457 = vdwg.mxu0
    %v458 = vperm.slane %v45, 1
    %v459 = vadd.f32 %v429, %v458
    %v460 = vadd.f32 %v456, %v458
    %v461 = vsel %vm53, %v459, 0.0
    %462 = vadd.xlane.f32.xlu0 %v461
    %v463 = vpop.xlane.xlu0 %462
    %v464 = vsel %vm53, %v460, 0.0
    %465 = vadd.xlane.f32.xlu0 %v464
    %v466 = vpop.xlane.xlu0 %465
    %v467 = vrcp.pop 32.0
    %v468 = vmul.f32 32.0, %v467
    %v469 = vsub.f32 1.0, %v468
    %v470 = vmul.f32 %v467, %v469
    %v471 = vadd.f32 %v467, %v470
    %vm472 = vweird.f32 %v467
    %v473 = vsel %vm472, %v467, %v471
    %v474 = vmul.f32 %v463, %v473
    %v475 = vmul.f32 %v466, %v473
    %v476 = vsub.f32 %v459, %v474
    %v477 = vsub.f32 %v460, %v475
    %v478 = vmul.f32 %v476, %v476
    %v479 = vmul.f32 %v477, %v477
    %v480 = vsel %vm53, %v478, 0.0
    %481 = vadd.xlane.f32.xlu0 %v480
    %v482 = vpop.xlane.xlu0 %481
    %v483 = vsel %vm53, %v479, 0.0
    %484 = vadd.xlane.f32.xlu0 %v483
    %v485 = vpop.xlane.xlu0 %484
    %v486 = vmul.f32 %v482, %v473
    %v487 = vmul.f32 %v485, %v473
    %v488 = vadd.f32 %v486, 1e-05
    %v489 = vadd.f32 %v487, 1e-05
    %v490 = vrsqrt.pop %v488
    %v491 = vmul.f32 %v490, %v488
    %v492 = vmul.f32 %v491, %v490
    %v493 = vmul.f32 0.5, %v492
    %v494 = vsub.f32 1.5, %v493
    %v495 = vmul.f32 %v490, %v494
    %vm496 = vweird.f32 %v488
    %vm497 = vweird.f32 %v490
    %vm498 = vmor %vm496, %vm497
    %v499 = vsel %vm498, %v490, %v495
    %v500 = vrsqrt.pop %v489
    %v501 = vmul.f32 %v500, %v489
    %v502 = vmul.f32 %v501, %v500
    %v503 = vmul.f32 0.5, %v502
    %v504 = vsub.f32 1.5, %v503
    %v505 = vmul.f32 %v500, %v504
    %vm506 = vweird.f32 %v489
    %vm507 = vweird.f32 %v500
    %vm508 = vmor %vm506, %vm507
    %v509 = vsel %vm508, %v500, %v505
    %v510 = vmul.f32 %v476, %v499
    %v511 = vmul.f32 %v477, %v509
    %v512 = vperm.slane %v45, 2
    %v513 = vmul.f32 %v510, %v512
    %v514 = vmul.f32 %v511, %v512
    %v515 = vperm.slane %v45, 3
    %v516 = vadd.f32 %v513, %v515
    %v517 = vadd.f32 %v514, %v515
    %v518 = vadd.f32 %v43, %v516
    %v519 = vadd.f32 %v44, %v517
    %520 = vst.msk [vmem:[#allocation5] sm:$0xff] %vm53, %v518
    %521 = vst.msk [vmem:[#allocation5 + $0x8] sm:$0xff] %vm53, %v519
    // Predicated region
    $region34: #{tpu_custom_call.1} parent=1 // pred_check
      _
    $region35: #{tpu_custom_call.1} parent=1 // pred_check_branch
      %523 = sbr.rel (0) target = $region37
    $region36: #{tpu_custom_call.1} parent=1 // pred_region
      %525 = vsyncadd [#allocation4], 0
      %s526 = sshll.u32 [#allocation5], 4
      %s527 = int_to_ptr.vmem [resolvable:$true] %s526
      %s528 = sshll.u32 %s7, 4
      %s529 = int_to_ptr.hbm [resolvable:$true] %s528
      %534 = dma.vmem_to_hbm [thread:$0]  %s527, 256, %s529, [#allocation4], 128, 128, 8
    $region37: #{tpu_custom_call.1} parent=1 // pred_fallthru
      _
    // Predicated region
    $region38: #{tpu_custom_call.1} parent=1 // pred_check
      _
    $region39: #{tpu_custom_call.1} parent=1 // pred_check_branch
      %536 = sbr.rel (0) target = $region41
    $region40: #{tpu_custom_call.1} parent=1 // pred_region
      %538 = dma.done [#allocation4], 256
    $region41: #{tpu_custom_call.1} parent=1 // pred_fallthru
      _
    %539 = vsyncpa [#allocation3], 1
    %540 = vsyncpa [#allocation4], 1

</llo_original>
